<compile_context>
chip_gen: v7x
topology: tpu7x:2x2x1
jax: 0.10.0
libtpu: 0.0.40
codegen_flags: <defaults>
</compile_context>

<pallas_src>
import jax
import jax.numpy as jnp
from jax.experimental import pallas as pl
from jax.experimental.pallas import tpu as pltpu

_SUB, _LANE = 8, 128


def _round_up(v, m):
    return -(-v // m) * m


def _vmem_limit_bytes():
    """Generation-aware scoped-VMEM limit (half of physical, floor 32 MiB)."""
    try:
        cap = int(pltpu.get_tpu_info().vmem_capacity_bytes)
    except Exception:
        cap = 64 * 1024 * 1024          # conservative: v7x per-TensorCore VMEM
    return max(32 * 1024 * 1024, cap // 2)


def _pick_tiles(B, N, D, x_isz, w_isz, b_isz, o_isz, budget):
    """Pick (TB, TN) whose pipelined VMEM footprint stays inside `budget`."""
    d_pad = _round_up(max(D, 1), _LANE)

    def pad_rows(rows, isz):            # sublane padding: 8 f32 / 16 bf16 rows
        return _round_up(rows, max(_SUB, 32 // isz))

    def footprint(tb, tn):
        x_blk = 2 * tb * pad_rows(tn, x_isz) * d_pad * x_isz      # double-buffered stream
        w_blk = 1 * pad_rows(tn, w_isz) * d_pad * w_isz           # single-buffered weights
        b_blk = 2 * pad_rows(1, b_isz) * _round_up(tn, _LANE) * b_isz
        o_blk = 2 * pad_rows(tb, o_isz) * _round_up(tn, _LANE) * o_isz
        return x_blk + w_blk + b_blk + o_blk

    def best_tb(tn):
        if footprint(B, tn) <= budget:
            return B
        fixed = footprint(0, tn)                                  # weights + bias
        per_row = (2 * pad_rows(tn, x_isz) * d_pad * x_isz
                   + 2 * _round_up(tn, _LANE) * o_isz)
        tb = (budget - fixed) // per_row if budget > fixed else 0
        tb = min((tb // _SUB) * _SUB, ((B - 1) // _SUB) * _SUB)   # multiple of 8, < B
        while tb >= _SUB and footprint(tb, tn) > budget:
            tb -= _SUB
        return tb if tb >= _SUB else None

    def shrink(tn):                      # when tiled, TN stays a multiple of 128
        return max(_LANE, ((tn // 2) // _LANE) * _LANE)

    tn = N if N <= 2048 else 2048
    # never let the resident weight block alone eat more than half the budget
    while tn > _LANE and pad_rows(tn, w_isz) * d_pad * w_isz > budget // 2:
        tn = shrink(tn)
    while True:
        tb = best_tb(tn)
        if tb is not None:
            return tb, min(tn, N)
        if tn <= _LANE:
            break
        tn = shrink(tn)
    # pathological (enormous D): smallest legal tiles; correctness unaffected.
    return (B if B <= _SUB else _SUB), (N if N <= _LANE else _LANE)


def _unembed_kernel(x_ref, w_ref, b_ref, o_ref):
    # x_ref: (TB, TN, D)   w_ref: (TN, D)   b_ref: (1, TN)   o_ref: (TB, TN)
    prod = x_ref[...] * w_ref[...][None, :, :]          # VPU mul in the input dtype
    acc = jnp.sum(prod, axis=-1, dtype=jnp.float32)     # f32 accumulation over d_model
    o_ref[...] = (acc + b_ref[...].astype(jnp.float32)).astype(o_ref.dtype)


def _build(B, N, D, TB, TN, out_dtype, vmem_limit, single_buffer_w):
    if single_buffer_w:
        # weight block index is constant across the inner batch axis: single-buffer it
        w_spec = pl.BlockSpec((TN, D), lambda ni, bi: (ni, 0),
                              pipeline_mode=pl.Buffered(1))
    else:
        w_spec = pl.BlockSpec((TN, D), lambda ni, bi: (ni, 0))
    return pl.pallas_call(
        _unembed_kernel,
        out_shape=jax.ShapeDtypeStruct((B, N), out_dtype),
        grid_spec=pltpu.PrefetchScalarGridSpec(
            num_scalar_prefetch=0,
            grid=(pl.cdiv(N, TN), pl.cdiv(B, TB)),     # batch innermost -> w stays resident
            in_specs=[
                pl.BlockSpec((TB, TN, D), lambda ni, bi: (bi, ni, 0)),   # streamed activations
                w_spec,                                                  # resident weights
                pl.BlockSpec((1, TN), lambda ni, bi: (0, ni)),           # bias
            ],
            out_specs=pl.BlockSpec((TB, TN), lambda ni, bi: (bi, ni)),
        ),
        compiler_params=pltpu.CompilerParams(
            dimension_semantics=("parallel", "parallel"),
            vmem_limit_bytes=int(vmem_limit),
        ),
    )


def unembedding_forward(x, w, b):
    """x: (B, N, D); w: (N, D); b: (N,)  ->  (B, N, 1).

    For best HBM bandwidth pass x (and w) as bf16; accumulation stays f32 and the
    output dtype follows x (same as the PyTorch module).
    """
    B, N, D = x.shape
    assert w.shape == (N, D) and b.shape == (N,)
    vmem_limit = _vmem_limit_bytes()
    budget = int(vmem_limit * 0.85)            # headroom for compiler scratch
    TB, TN = _pick_tiles(
        B, N, D,
        jnp.dtype(x.dtype).itemsize, jnp.dtype(w.dtype).itemsize,
        jnp.dtype(b.dtype).itemsize, jnp.dtype(x.dtype).itemsize,
        budget)
    # v7x megacore: only when the N axis is a single tile, keep >= 2 batch tiles
    # so both TensorCores get work (cheap on 1-TC chips: one extra grid step).
    if pl.cdiv(N, TN) == 1 and TB == B and B >= 16:
        TB = _round_up(-(-B // 2), _SUB)

    b2d = b.reshape(1, N)
    try:
        out = _build(B, N, D, TB, TN, x.dtype, vmem_limit, True)(x, w, b2d)
    except Exception:
        # pl.Buffered(1) not supported on this jax version -> default double-buffering
        out = _build(B, N, D, TB, TN, x.dtype, vmem_limit, False)(x, w, b2d)
    return out[..., None]                      # (B, N, 1) == torch.stack([...], dim=1)


if __name__ == "__main__":
    B, num_neurons, d_model = 2, 8, 32

    key = jax.random.PRNGKey(0)
    kx, kw, kb = jax.random.split(key, 3)

    x = jax.random.normal(kx, (B, num_neurons, d_model), dtype=jnp.float32)
    # one Linear(d_model, 1) per neuron -> stacked weight (num_neurons, d_model), bias (num_neurons,)
    w = jax.random.normal(kw, (num_neurons, d_model), dtype=jnp.float32) * (1.0 / (d_model ** 0.5))
    bias = jax.random.normal(kb, (num_neurons,), dtype=jnp.float32) * 0.01

    out = jax.block_until_ready(unembedding_forward(x, w, bias))

    # reference check in plain JAX (same semantics as the PyTorch module)
    ref = (jnp.einsum("bnd,nd->bn", x, w) + bias)[..., None]
    assert out.shape == (B, num_neurons, 1)
    assert jnp.allclose(out, ref, atol=1e-5, rtol=1e-5)

    print("KERNEL_OK")
</pallas_src>

<mosaic_0001>
module attributes {stable_mosaic.version = 11 : i64} {
  func.func @_unembed_kernel(%arg0: i32, %arg1: i32, %arg2: memref<2x8x32xf32, #tpu.memory_space<vmem>>, %arg3: memref<8x32xf32, #tpu.memory_space<vmem>>, %arg4: memref<1x8xf32, #tpu.memory_space<vmem>>, %arg5: memref<2x8xf32, #tpu.memory_space<vmem>>) attributes {dimension_semantics = [#tpu.dimension_semantics<parallel>, #tpu.dimension_semantics<parallel>], iteration_bounds = array<i64: 1, 1>, scalar_prefetch = 0 : i64, scratch_operands = 0 : i64, tpu.core_type = #tpu.core_type<tc>, window_params = [{transform_indices = @transform_0, window_bounds = array<i64: 2, 8, 32>}, {pipeline_mode = #tpu.pipeline_mode<synchronous>, transform_indices = @transform_1, window_bounds = array<i64: 8, 32>}, {transform_indices = @transform_2, window_bounds = array<i64: 1, 8>}, {transform_indices = @transform_3, window_bounds = array<i64: 2, 8>}]} {
    %c0 = arith.constant 0 : index
    %c0_0 = arith.constant 0 : index
    %c0_1 = arith.constant 0 : index
    %0 = vector.load %arg2[%c0, %c0_0, %c0_1] : memref<2x8x32xf32, #tpu.memory_space<vmem>>, vector<2x8x32xf32>
    %c0_2 = arith.constant 0 : index
    %c0_3 = arith.constant 0 : index
    %1 = vector.load %arg3[%c0_2, %c0_3] : memref<8x32xf32, #tpu.memory_space<vmem>>, vector<8x32xf32>
    %2 = vector.shape_cast %1 : vector<8x32xf32> to vector<1x8x32xf32>
    %3 = vector.broadcast %2 : vector<1x8x32xf32> to vector<2x8x32xf32>
    %4 = arith.mulf %0, %3 : vector<2x8x32xf32>
    %cst = arith.constant dense<0.000000e+00> : vector<2x8xf32>
    %5 = vector.multi_reduction <add>, %4, %cst [2] : vector<2x8x32xf32> to vector<2x8xf32>
    %c0_4 = arith.constant 0 : index
    %c0_5 = arith.constant 0 : index
    %6 = vector.load %arg4[%c0_4, %c0_5] : memref<1x8xf32, #tpu.memory_space<vmem>>, vector<1x8xf32>
    %7 = vector.broadcast %6 : vector<1x8xf32> to vector<2x8xf32>
    %8 = arith.addf %5, %7 : vector<2x8xf32>
    %c0_6 = arith.constant 0 : index
    %c0_7 = arith.constant 0 : index
    %9 = vector.load %arg5[%c0_6, %c0_7] : memref<2x8xf32, #tpu.memory_space<vmem>>, vector<2x8xf32>
    tpu.vector_store %arg5[%c0_6, %c0_7], %8 {strides = array<i32>} : memref<2x8xf32, #tpu.memory_space<vmem>>, vector<2x8xf32>,
    return
  }
  func.func @transform_0(%arg0: i32, %arg1: i32) -> (i32, i32, i32) {
    %c0_i32 = arith.constant 0 : i32
    %c0_i32_0 = arith.constant 0 : i32
    return %arg1, %arg0, %c0_i32 : i32, i32, i32
  }
  func.func @transform_1(%arg0: i32, %arg1: i32) -> (i32, i32) {
    %c0_i32 = arith.constant 0 : i32
    %c0_i32_0 = arith.constant 0 : i32
    return %arg0, %c0_i32 : i32, i32
  }
  func.func @transform_2(%arg0: i32, %arg1: i32) -> (i32, i32) {
    %c0_i32 = arith.constant 0 : i32
    %c0_i32_0 = arith.constant 0 : i32
    return %c0_i32, %arg0 : i32, i32
  }
  func.func @transform_3(%arg0: i32, %arg1: i32) -> (i32, i32) {
    %c0_i32 = arith.constant 0 : i32
    return %arg1, %arg0 : i32, i32
  }
}

module attributes {stable_mosaic.version = 11 : i64} {
  func.func @_unembed_kernel(%arg0: i32, %arg1: i32, %arg2: memref<2x8x32xf32, #tpu.memory_space<vmem>>, %arg3: memref<8x32xf32, #tpu.memory_space<vmem>>, %arg4: memref<1x8xf32, #tpu.memory_space<vmem>>, %arg5: memref<2x8xf32, #tpu.memory_space<vmem>>) attributes {dimension_semantics = [#tpu.dimension_semantics<parallel>, #tpu.dimension_semantics<parallel>], iteration_bounds = array<i64: 1, 1>, scalar_prefetch = 0 : i64, scratch_operands = 0 : i64, tpu.core_type = #tpu.core_type<tc>, window_params = [{transform_indices = @transform_0, window_bounds = array<i64: 2, 8, 32>}, {transform_indices = @transform_1, window_bounds = array<i64: 8, 32>}, {transform_indices = @transform_2, window_bounds = array<i64: 1, 8>}, {transform_indices = @transform_3, window_bounds = array<i64: 2, 8>}]} {
    %c0 = arith.constant 0 : index
    %c0_0 = arith.constant 0 : index
    %c0_1 = arith.constant 0 : index
    %0 = vector.load %arg2[%c0, %c0_0, %c0_1] : memref<2x8x32xf32, #tpu.memory_space<vmem>>, vector<2x8x32xf32>
    %c0_2 = arith.constant 0 : index
    %c0_3 = arith.constant 0 : index
    %1 = vector.load %arg3[%c0_2, %c0_3] : memref<8x32xf32, #tpu.memory_space<vmem>>, vector<8x32xf32>
    %2 = vector.shape_cast %1 : vector<8x32xf32> to vector<1x8x32xf32>
    %3 = vector.broadcast %2 : vector<1x8x32xf32> to vector<2x8x32xf32>
    %4 = arith.mulf %0, %3 : vector<2x8x32xf32>
    %cst = arith.constant dense<0.000000e+00> : vector<2x8xf32>
    %5 = vector.multi_reduction <add>, %4, %cst [2] : vector<2x8x32xf32> to vector<2x8xf32>
    %c0_4 = arith.constant 0 : index
    %c0_5 = arith.constant 0 : index
    %6 = vector.load %arg4[%c0_4, %c0_5] : memref<1x8xf32, #tpu.memory_space<vmem>>, vector<1x8xf32>
    %7 = vector.broadcast %6 : vector<1x8xf32> to vector<2x8xf32>
    %8 = arith.addf %5, %7 : vector<2x8xf32>
    %c0_6 = arith.constant 0 : index
    %c0_7 = arith.constant 0 : index
    %9 = vector.load %arg5[%c0_6, %c0_7] : memref<2x8xf32, #tpu.memory_space<vmem>>, vector<2x8xf32>
    tpu.vector_store %arg5[%c0_6, %c0_7], %8 {strides = array<i32>} : memref<2x8xf32, #tpu.memory_space<vmem>>, vector<2x8xf32>,
    return
  }
  func.func @transform_0(%arg0: i32, %arg1: i32) -> (i32, i32, i32) {
    %c0_i32 = arith.constant 0 : i32
    %c0_i32_0 = arith.constant 0 : i32
    return %arg1, %arg0, %c0_i32 : i32, i32, i32
  }
  func.func @transform_1(%arg0: i32, %arg1: i32) -> (i32, i32) {
    %c0_i32 = arith.constant 0 : i32
    %c0_i32_0 = arith.constant 0 : i32
    return %arg0, %c0_i32 : i32, i32
  }
  func.func @transform_2(%arg0: i32, %arg1: i32) -> (i32, i32) {
    %c0_i32 = arith.constant 0 : i32
    %c0_i32_0 = arith.constant 0 : i32
    return %c0_i32, %arg0 : i32, i32
  }
  func.func @transform_3(%arg0: i32, %arg1: i32) -> (i32, i32) {
    %c0_i32 = arith.constant 0 : i32
    return %arg1, %arg0 : i32, i32
  }
}

</mosaic_0001>

<llo_original>
// kernel: tpu_custom_call.1
$region0: #{tpu_custom_call.1}
  #allocation0 [shape = 'u32[]', space=smem, size = 0x4, offset = 0x4, fixed_abs, tag = 'smem constant byte address 0x4 - core index']
  #allocation1 [shape = 'u32[144,128]{1,0:T(1,128)}', space=vmem, size = 0x12000, scoped, tag = 'internal scratch']
  %s0 = inlined_call_operand.hbm [shape: f32[2,8,32], index: 0, kind: input, shape index: {}]
  %s1 = inlined_call_operand.hbm [shape: f32[8,32], index: 1, kind: input, shape index: {}]
  %s2 = inlined_call_operand.vmem [shape: f32[1,8], index: 2, kind: input, shape index: {}]
  %s3 = inlined_call_operand.hbm [shape: f32[2,8], index: 3, kind: output, shape index: {}]
  %s4 = sld [smem:[#allocation0]]
  $region30: #{tpu_custom_call.1} parent=0
    _
  %s6 = ssub.s32 1, %s4
  %s7 = scalar_select 0, %s6, %s4
  $region1: #{tpu_custom_call.1} parent=0
    #allocation2 [shape = 'u8[8192]{0}', space=vmem, size = 0x2000, scoped, tag = 'input window, operand 0, single buffered']
    #allocation3 [shape = 's32[1]{0}', space=sflag, size = 0x4, scoped, tag = 'scoped memory for tpu_custom_call.1']
    #allocation4 [shape = 's32[1]{0}', space=sflag, size = 0x4, scoped, tag = 'scoped memory for tpu_custom_call.1']
    #allocation5 [shape = 'u8[4096]{0}', space=vmem, size = 0x1000, scoped, tag = 'input window, operand 1, single buffered']
    #allocation6 [shape = 's32[1]{0}', space=sflag, size = 0x4, scoped, tag = 'scoped memory for tpu_custom_call.1']
    #allocation7 [shape = 'u8[1024]{0}', space=vmem, size = 0x400, scoped, tag = 'output window, operand 0, single buffered']
    %8 = vsyncpa [#allocation3], 0
    %9 = vsyncpa [#allocation6], 0
    %10 = vsyncpa [#allocation4], 0
    // Predicated region
    $region2: #{tpu_custom_call.1} parent=1 // pred_check
      _
    $region3: #{tpu_custom_call.1} parent=1 // pred_check_branch
      %12 = sbr.rel (0) target = $region5
    $region4: #{tpu_custom_call.1} parent=1 // pred_region
      %s14 = ssub.s32 256, 256
      %15 = vsyncadd [#allocation3], %s14
      %s16 = sshll.u32 [#allocation2], 4
      %s17 = int_to_ptr.vmem [resolvable:$true] %s16
      %22 = dma.hbm_to_vmem [thread:$0]  %s0, 256, %s17, [#allocation3], 128, 128, 8
    $region5: #{tpu_custom_call.1} parent=1 // pred_fallthru
      _
    // Predicated region
    $region6: #{tpu_custom_call.1} parent=1 // pred_check
      _
    $region7: #{tpu_custom_call.1} parent=1 // pred_check_branch
      %24 = sbr.rel (0) target = $region9
    $region8: #{tpu_custom_call.1} parent=1 // pred_region
      %s26 = ssub.s32 128, 128
      %27 = vsyncadd [#allocation6], %s26
      %s29 = sshll.u32 [#allocation5], 4
      %s30 = int_to_ptr.vmem [resolvable:$true] %s29
      %32 = dma.hbm_to_vmem [thread:$0]  %s1, 128, %s30, [#allocation6]
    $region9: #{tpu_custom_call.1} parent=1 // pred_fallthru
      _
    // Predicated region
    $region10: #{tpu_custom_call.1} parent=1 // pred_check
      _
    $region11: #{tpu_custom_call.1} parent=1 // pred_check_branch
      %34 = sbr.rel (0) target = $region13
    $region12: #{tpu_custom_call.1} parent=1 // pred_region
      _
    $region13: #{tpu_custom_call.1} parent=1 // pred_fallthru
      _
    // Predicated region
    $region14: #{tpu_custom_call.1} parent=1 // pred_check
      _
    $region15: #{tpu_custom_call.1} parent=1 // pred_check_branch
      %36 = sbr.rel (0) target = $region17
    $region16: #{tpu_custom_call.1} parent=1 // pred_region
      %37 = dma.done [#allocation3], 256
    $region17: #{tpu_custom_call.1} parent=1 // pred_fallthru
      _
    // Predicated region
    $region18: #{tpu_custom_call.1} parent=1 // pred_check
      _
    $region19: #{tpu_custom_call.1} parent=1 // pred_check_branch
      %39 = sbr.rel (0) target = $region21
    $region20: #{tpu_custom_call.1} parent=1 // pred_region
      %40 = dma.done [#allocation6], 128
    $region21: #{tpu_custom_call.1} parent=1 // pred_fallthru
      _
    %v41 = vld [vmem:[#allocation2] sm:$0xff]
    %v42 = vld [vmem:[#allocation2 + $0x8] sm:$0xff]
    %v43 = vld [vmem:[#allocation5] sm:$0xff]
    %v44 = vmul.f32 %v41, %v43
    %v45 = vmul.f32 %v42, %v43
    %vm46 = vcmask 261120
    %v47 = vsel %vm46, %v44, 0.0
    %48 = vadd.xlane.f32.xlu0 %v47
    %v49 = vpop.xlane.xlu0 %48
    %v50 = vsel %vm46, %v45, 0.0
    %51 = vadd.xlane.f32.xlu0 %v50
    %v52 = vpop.xlane.xlu0 %51
    %v53 = vld [vmem:[%s2] sm:$0x1]
    %v55 = vlaneseq
    %v56 = vshrl.u32 %v55, 7
    %v57 = vsub.s32 0, %v56
    %v58 = vrot.slane %v53, %v57
    %60 = vbcast.lane.b32.xlu0 %v58, 256
    %v61 = vpop.permute.xlu0 %60
    %v63 = vadd.f32 %v49, %v61
    %v64 = vadd.f32 %v52, %v61
    %67 = vset.pattern.permute.xlu0 0
    %68 = vperm.xlu0 %67, %v63
    %v69 = vpop.permute.xlu0 %68
    %70 = vset.pattern.permute.xlu0 0
    %71 = vperm.xlu0 %70, %v64
    %v72 = vpop.permute.xlu0 %71
    %v73 = vlaneseq
    %v74 = vand.u32 %v73, 127
    %v75 = vlaneseq
    %v76 = vshrl.u32 %v75, 7
    %v77 = vsub.s32 %v74, %v76
    %v78 = vrot.slane %v69, %v77
    %v79 = vlaneseq
    %v80 = vshrl.u32 %v79, 7
    %v81 = vsub.s32 %v74, %v80
    %v82 = vrot.slane %v72, %v81
    %vm83 = vcmask 1041409
    %v84 = vsel %vm83, %v82, %v78
    %vm86 = vcmask 58368
    %87 = vst.msk [vmem:[#allocation7] sm:$0x3] %vm86, %v84
    // Predicated region
    $region22: #{tpu_custom_call.1} parent=1 // pred_check
      _
    $region23: #{tpu_custom_call.1} parent=1 // pred_check_branch
      %89 = sbr.rel (0) target = $region25
    $region24: #{tpu_custom_call.1} parent=1 // pred_region
      %s91 = ssub.s32 32, 32
      %92 = vsyncadd [#allocation4], %s91
      %s94 = sshll.u32 [#allocation7], 4
      %s95 = int_to_ptr.vmem [resolvable:$true] %s94
      %97 = dma.vmem_to_hbm [thread:$0]  %s95, 32, %s3, [#allocation4]
    $region25: #{tpu_custom_call.1} parent=1 // pred_fallthru
      _
    // Predicated region
    $region26: #{tpu_custom_call.1} parent=1 // pred_check
      _
    $region27: #{tpu_custom_call.1} parent=1 // pred_check_branch
      %99 = sbr.rel (0) target = $region29
    $region28: #{tpu_custom_call.1} parent=1 // pred_region
      %100 = dma.done [#allocation4], 32
    $region29: #{tpu_custom_call.1} parent=1 // pred_fallthru
      _
    %101 = vsyncpa [#allocation3], 1
    %102 = vsyncpa [#allocation6], 1
    %103 = vsyncpa [#allocation4], 1

// kernel: tpu_custom_call.1
$region0: #{tpu_custom_call.1}
  #allocation0 [shape = 'u32[]', space=smem, size = 0x4, offset = 0x4, fixed_abs, tag = 'smem constant byte address 0x4 - core index']
  #allocation1 [shape = 'u32[144,128]{1,0:T(1,128)}', space=vmem, size = 0x12000, scoped, tag = 'internal scratch']
  %s0 = inlined_call_operand.hbm [shape: f32[2,8,32], index: 0, kind: input, shape index: {}]
  %s1 = inlined_call_operand.hbm [shape: f32[8,32], index: 1, kind: input, shape index: {}]
  %s2 = inlined_call_operand.vmem [shape: f32[1,8], index: 2, kind: input, shape index: {}]
  %s3 = inlined_call_operand.hbm [shape: f32[2,8], index: 3, kind: output, shape index: {}]
  %s4 = sld [smem:[#allocation0]]
  $region30: #{tpu_custom_call.1} parent=0
    _
  %s6 = ssub.s32 1, %s4
  %s7 = scalar_select 0, %s6, %s4
  $region1: #{tpu_custom_call.1} parent=0
    #allocation2 [shape = 'u8[8192]{0}', space=vmem, size = 0x2000, scoped, tag = 'input window, operand 0, single buffered']
    #allocation3 [shape = 's32[1]{0}', space=sflag, size = 0x4, scoped, tag = 'scoped memory for tpu_custom_call.1']
    #allocation4 [shape = 's32[1]{0}', space=sflag, size = 0x4, scoped, tag = 'scoped memory for tpu_custom_call.1']
    #allocation5 [shape = 'u8[4096]{0}', space=vmem, size = 0x1000, scoped, tag = 'input window, operand 1, single buffered']
    #allocation6 [shape = 's32[1]{0}', space=sflag, size = 0x4, scoped, tag = 'scoped memory for tpu_custom_call.1']
    #allocation7 [shape = 'u8[1024]{0}', space=vmem, size = 0x400, scoped, tag = 'output window, operand 0, single buffered']
    %8 = vsyncpa [#allocation3], 0
    %9 = vsyncpa [#allocation6], 0
    %10 = vsyncpa [#allocation4], 0
    // Predicated region
    $region2: #{tpu_custom_call.1} parent=1 // pred_check
      _
    $region3: #{tpu_custom_call.1} parent=1 // pred_check_branch
      %12 = sbr.rel (0) target = $region5
    $region4: #{tpu_custom_call.1} parent=1 // pred_region
      %s14 = ssub.s32 256, 256
      %15 = vsyncadd [#allocation3], %s14
      %s16 = sshll.u32 [#allocation2], 4
      %s17 = int_to_ptr.vmem [resolvable:$true] %s16
      %22 = dma.hbm_to_vmem [thread:$0]  %s0, 256, %s17, [#allocation3], 128, 128, 8
    $region5: #{tpu_custom_call.1} parent=1 // pred_fallthru
      _
    // Predicated region
    $region6: #{tpu_custom_call.1} parent=1 // pred_check
      _
    $region7: #{tpu_custom_call.1} parent=1 // pred_check_branch
      %24 = sbr.rel (0) target = $region9
    $region8: #{tpu_custom_call.1} parent=1 // pred_region
      %s26 = ssub.s32 128, 128
      %27 = vsyncadd [#allocation6], %s26
      %s29 = sshll.u32 [#allocation5], 4
      %s30 = int_to_ptr.vmem [resolvable:$true] %s29
      %32 = dma.hbm_to_vmem [thread:$0]  %s1, 128, %s30, [#allocation6]
    $region9: #{tpu_custom_call.1} parent=1 // pred_fallthru
      _
    // Predicated region
    $region10: #{tpu_custom_call.1} parent=1 // pred_check
      _
    $region11: #{tpu_custom_call.1} parent=1 // pred_check_branch
      %34 = sbr.rel (0) target = $region13
    $region12: #{tpu_custom_call.1} parent=1 // pred_region
      _
    $region13: #{tpu_custom_call.1} parent=1 // pred_fallthru
      _
    // Predicated region
    $region14: #{tpu_custom_call.1} parent=1 // pred_check
      _
    $region15: #{tpu_custom_call.1} parent=1 // pred_check_branch
      %36 = sbr.rel (0) target = $region17
    $region16: #{tpu_custom_call.1} parent=1 // pred_region
      %37 = dma.done [#allocation3], 256
    $region17: #{tpu_custom_call.1} parent=1 // pred_fallthru
      _
    // Predicated region
    $region18: #{tpu_custom_call.1} parent=1 // pred_check
      _
    $region19: #{tpu_custom_call.1} parent=1 // pred_check_branch
      %39 = sbr.rel (0) target = $region21
    $region20: #{tpu_custom_call.1} parent=1 // pred_region
      %40 = dma.done [#allocation6], 128
    $region21: #{tpu_custom_call.1} parent=1 // pred_fallthru
      _
    %v41 = vld [vmem:[#allocation2] sm:$0xff]
    %v42 = vld [vmem:[#allocation2 + $0x8] sm:$0xff]
    %v43 = vld [vmem:[#allocation5] sm:$0xff]
    %v44 = vmul.f32 %v41, %v43
    %v45 = vmul.f32 %v42, %v43
    %vm46 = vcmask 261120
    %v47 = vsel %vm46, %v44, 0.0
    %48 = vadd.xlane.f32.xlu0 %v47
    %v49 = vpop.xlane.xlu0 %48
    %v50 = vsel %vm46, %v45, 0.0
    %51 = vadd.xlane.f32.xlu0 %v50
    %v52 = vpop.xlane.xlu0 %51
    %v53 = vld [vmem:[%s2] sm:$0x1]
    %v55 = vlaneseq
    %v56 = vshrl.u32 %v55, 7
    %v57 = vsub.s32 0, %v56
    %v58 = vrot.slane %v53, %v57
    %60 = vbcast.lane.b32.xlu0 %v58, 256
    %v61 = vpop.permute.xlu0 %60
    %v63 = vadd.f32 %v49, %v61
    %v64 = vadd.f32 %v52, %v61
    %67 = vset.pattern.permute.xlu0 0
    %68 = vperm.xlu0 %67, %v63
    %v69 = vpop.permute.xlu0 %68
    %70 = vset.pattern.permute.xlu0 0
    %71 = vperm.xlu0 %70, %v64
    %v72 = vpop.permute.xlu0 %71
    %v73 = vlaneseq
    %v74 = vand.u32 %v73, 127
    %v75 = vlaneseq
    %v76 = vshrl.u32 %v75, 7
    %v77 = vsub.s32 %v74, %v76
    %v78 = vrot.slane %v69, %v77
    %v79 = vlaneseq
    %v80 = vshrl.u32 %v79, 7
    %v81 = vsub.s32 %v74, %v80
    %v82 = vrot.slane %v72, %v81
    %vm83 = vcmask 1041409
    %v84 = vsel %vm83, %v82, %v78
    %vm86 = vcmask 58368
    %87 = vst.msk [vmem:[#allocation7] sm:$0x3] %vm86, %v84
    // Predicated region
    $region22: #{tpu_custom_call.1} parent=1 // pred_check
      _
    $region23: #{tpu_custom_call.1} parent=1 // pred_check_branch
      %89 = sbr.rel (0) target = $region25
    $region24: #{tpu_custom_call.1} parent=1 // pred_region
      %s91 = ssub.s32 32, 32
      %92 = vsyncadd [#allocation4], %s91
      %s94 = sshll.u32 [#allocation7], 4
      %s95 = int_to_ptr.vmem [resolvable:$true] %s94
      %97 = dma.vmem_to_hbm [thread:$0]  %s95, 32, %s3, [#allocation4]
    $region25: #{tpu_custom_call.1} parent=1 // pred_fallthru
      _
    // Predicated region
    $region26: #{tpu_custom_call.1} parent=1 // pred_check
      _
    $region27: #{tpu_custom_call.1} parent=1 // pred_check_branch
      %99 = sbr.rel (0) target = $region29
    $region28: #{tpu_custom_call.1} parent=1 // pred_region
      %100 = dma.done [#allocation4], 32
    $region29: #{tpu_custom_call.1} parent=1 // pred_fallthru
      _
    %101 = vsyncpa [#allocation3], 1
    %102 = vsyncpa [#allocation6], 1
    %103 = vsyncpa [#allocation4], 1

</llo_original>
